<compile_context>
chip_gen: v7x
topology: tpu7x:2x2x1
jax: 0.10.0
libtpu: 0.0.40
codegen_flags: <defaults>
</compile_context>

<pallas_src>
import jax
import jax.numpy as jnp
from jax.experimental import pallas as pl
from jax.experimental.pallas import tpu as pltpu


def _rup(v, m):
    return (v + m - 1) // m * m


def _rabi_mlp_kernel(x_ref, w1_ref, b1_ref, w2_ref, b2_ref, o_ref):
    # Hidden layer: (TB, d_in) @ (d_in, N_h_p) + (1, N_h_p); f32 accumulation.
    x = x_ref[...].astype(w1_ref.dtype)            # match MXU operand dtypes
    h = jnp.dot(x, w1_ref[...], preferred_element_type=jnp.float32)
    h = jnp.maximum(h + b1_ref[...], 0.0)          # bias + ReLU in f32 (VPU)
    # Output layer: (TB, N_h_p) @ (N_h_p, N*N) + (1, N*N); f32 accumulation.
    y = jnp.dot(h.astype(w2_ref.dtype), w2_ref[...],
                preferred_element_type=jnp.float32)
    o_ref[...] = (y + b2_ref[...]).astype(o_ref.dtype)


def prepare_params(w1, b1, w2, b2, weight_dtype=None):
    """Zero-pads ONLY the shared hidden dim (N_h) to a multiple of 128.

    d_in and the output dim stay unpadded (full-extent blocks are legal, and
    the kernel is memory-bound, so padded bytes only hurt).  Weights are stored
    (in_features, out_features) -- transpose of PyTorch's nn.Linear layout.
    `weight_dtype=jnp.bfloat16` halves weight DMA bytes and enables the bf16
    MXU path (the kernel casts activations to the weight dtype); biases stay
    float32 (bias + ReLU run in f32 on the VPU, correct on v5e too).
    """
    d_in, n_h = w1.shape
    n_out = w2.shape[1]
    n_h_p = _rup(n_h, 128)
    wd = w1.dtype if weight_dtype is None else weight_dtype

    w1_p = jnp.zeros((d_in, n_h_p), wd).at[:, :n_h].set(w1.astype(wd))
    b1_p = jnp.zeros((1, n_h_p), jnp.float32).at[:, :n_h].set(
        b1.astype(jnp.float32).reshape(1, n_h))
    w2_p = jnp.zeros((n_h_p, n_out), wd).at[:n_h, :].set(w2.astype(wd))
    b2_p = b2.astype(jnp.float32).reshape(1, n_out)
    return w1_p, b1_p, w2_p, b2_p


def rabi_encoder_forward(x, padded_params, N, *, block_b=512,
                         out_dtype=jnp.float32):
    """Runs the RabiEncoder MLP in one Pallas kernel; returns (B, N, N)."""
    w1_p, b1_p, w2_p, b2_p = padded_params
    B, d_in = x.shape
    _, n_h_p = w1_p.shape
    n_out = w2_p.shape[1]
    assert d_in == N * (N - 1) // 2
    assert n_out == N * N

    # Batch tile: multiple of 8 sublanes, big enough to amortize the ~0.35 us
    # per-grid-step overhead, but capped so medium batches still get >= 2 grid
    # steps (v7x megacore).  VMEM per step is ~TB*(d_in+n_out)*4 B => trivial.
    TB = max(8, min(block_b, _rup(-(-B // 2), 8)))
    B_p = _rup(B, TB)

    # Pad batch rows only when needed (no d_in inflation, no copy if aligned).
    if B_p != B:
        x_in = jnp.zeros((B_p, d_in), x.dtype).at[:B, :].set(x)
    else:
        x_in = x

    itemsize = lambda a: jnp.dtype(a.dtype).itemsize
    flops = 2 * B_p * (d_in * n_h_p + n_h_p * n_out)
    bytes_accessed = (x_in.size * itemsize(x_in)
                      + sum(p.size * itemsize(p) for p in padded_params)
                      + B_p * n_out * jnp.dtype(out_dtype).itemsize)

    out = pl.pallas_call(
        _rabi_mlp_kernel,
        out_shape=jax.ShapeDtypeStruct((B_p, n_out), out_dtype),
        grid=(B_p // TB,),
        in_specs=[
            pl.BlockSpec((TB, d_in), lambda i: (i, 0)),       # activations: tiled
            pl.BlockSpec((d_in, n_h_p), lambda i: (0, 0)),    # w1: resident
            pl.BlockSpec((1, n_h_p), lambda i: (0, 0)),       # b1: resident
            pl.BlockSpec((n_h_p, n_out), lambda i: (0, 0)),   # w2: resident
            pl.BlockSpec((1, n_out), lambda i: (0, 0)),       # b2: resident
        ],
        out_specs=pl.BlockSpec((TB, n_out), lambda i: (i, 0)),
        compiler_params=pltpu.CompilerParams(
            dimension_semantics=("parallel",)),
        cost_estimate=pl.CostEstimate(
            flops=flops, transcendentals=0, bytes_accessed=bytes_accessed),
    )(x_in, w1_p, b1_p, w2_p, b2_p)

    # Un-pad batch rows (if any) + reshape outside the kernel (free XLA glue).
    if B_p != B:
        out = out[:B]
    return out.reshape(B, N, N)


def init_params(key, N, N_h, dtype=jnp.float32):
    """Xavier-uniform-like init matching the nn.Linear shapes (cosmetic; load
    real weights for bit-matching a trained PyTorch module)."""
    d_in = N * (N - 1) // 2
    d_out = N * N
    k1, k2, k3, k4 = jax.random.split(key, 4)

    def xavier(k, fan_in, fan_out):
        limit = (6.0 / (fan_in + fan_out)) ** 0.5
        # stored as (in_features, out_features) => transpose of PyTorch layout
        return jax.random.uniform(k, (fan_in, fan_out), dtype, -limit, limit)

    def linear_bias(k, fan_in, fan_out):
        bound = 1.0 / (fan_in ** 0.5)
        return jax.random.uniform(k, (1, fan_out), dtype, -bound, bound)

    w1 = xavier(k1, d_in, N_h)
    b1 = linear_bias(k2, d_in, N_h)
    w2 = xavier(k3, N_h, d_out)
    b2 = linear_bias(k4, N_h, d_out)
    return w1, b1, w2, b2


if __name__ == "__main__":
    N = 8          # spin system size -> input dim = 28, output dim = 64
    N_h = 32       # hidden units

    key = jax.random.PRNGKey(0)
    k_x, k_p, k_xb = jax.random.split(key, 3)

    w1, b1, w2, b2 = init_params(k_p, N, N_h)
    padded = prepare_params(w1, b1, w2, b2)   # pad once (N_h only), reuse

    def ref(x):
        h = jnp.maximum(x @ w1 + b1, 0.0)
        return (h @ w2 + b2).reshape(x.shape[0], N, N)

    # Small-batch case (B=2): padded to one 8-row sublane group, grid=(1,).
    B = 2
    x = jax.random.normal(k_x, (B, N * (N - 1) // 2), jnp.float32)
    y = jax.block_until_ready(rabi_encoder_forward(x, padded, N))
    assert y.shape == (B, N, N)
    assert jnp.allclose(y, ref(x), atol=1e-5, rtol=1e-5)

    # Batched case (B=256): exercises the parallel batch grid (TB=128, 2 steps).
    Bb = 256
    xb = jax.random.normal(k_xb, (Bb, N * (N - 1) // 2), jnp.float32)
    yb = jax.block_until_ready(rabi_encoder_forward(xb, padded, N))
    assert yb.shape == (Bb, N, N)
    assert jnp.allclose(yb, ref(xb), atol=1e-5, rtol=1e-5)

    print("KERNEL_OK")
</pallas_src>

<mosaic_0001>
module attributes {stable_mosaic.version = 11 : i64} {
  func.func @_rabi_mlp_kernel(%arg0: i32, %arg1: memref<8x28xf32, #tpu.memory_space<vmem>>, %arg2: memref<28x128xf32, #tpu.memory_space<vmem>>, %arg3: memref<1x128xf32, #tpu.memory_space<vmem>>, %arg4: memref<128x64xf32, #tpu.memory_space<vmem>>, %arg5: memref<1x64xf32, #tpu.memory_space<vmem>>, %arg6: memref<8x64xf32, #tpu.memory_space<vmem>>) attributes {dimension_semantics = [#tpu.dimension_semantics<parallel>], iteration_bounds = array<i64: 1>, scalar_prefetch = 0 : i64, scratch_operands = 0 : i64, tpu.core_type = #tpu.core_type<tc>, window_params = [{transform_indices = @transform_0, window_bounds = array<i64: 8, 28>}, {pipeline_mode = #tpu.pipeline_mode<synchronous>, transform_indices = @transform_1, window_bounds = array<i64: 28, 128>}, {pipeline_mode = #tpu.pipeline_mode<synchronous>, transform_indices = @transform_2, window_bounds = array<i64: 1, 128>}, {pipeline_mode = #tpu.pipeline_mode<synchronous>, transform_indices = @transform_3, window_bounds = array<i64: 128, 64>}, {pipeline_mode = #tpu.pipeline_mode<synchronous>, transform_indices = @transform_4, window_bounds = array<i64: 1, 64>}, {transform_indices = @transform_5, window_bounds = array<i64: 8, 64>}]} {
    %c0 = arith.constant 0 : index
    %c0_0 = arith.constant 0 : index
    %0 = vector.load %arg1[%c0, %c0_0] : memref<8x28xf32, #tpu.memory_space<vmem>>, vector<8x28xf32>
    %c0_1 = arith.constant 0 : index
    %c0_2 = arith.constant 0 : index
    %1 = vector.load %arg2[%c0_1, %c0_2] : memref<28x128xf32, #tpu.memory_space<vmem>>, vector<28x128xf32>
    %cst = arith.constant dense<0.000000e+00> : vector<8x128xf32>
    %2 = tpu.matmul %0, %1, %cst {dimension_numbers = #tpu.dot_dimension_numbers<[1], [0], [0], [1], [0, 0, 1, 1], [], []>} : vector<8x28xf32>, vector<28x128xf32>, vector<8x128xf32> -> vector<8x128xf32>
    %c0_3 = arith.constant 0 : index
    %c0_4 = arith.constant 0 : index
    %3 = vector.load %arg3[%c0_3, %c0_4] : memref<1x128xf32, #tpu.memory_space<vmem>>, vector<1x128xf32>
    %4 = vector.broadcast %3 : vector<1x128xf32> to vector<8x128xf32>
    %5 = arith.addf %2, %4 : vector<8x128xf32>
    %cst_5 = arith.constant 0.000000e+00 : f32
    %6 = vector.broadcast %cst_5 : f32 to vector<8x128xf32>
    %7 = arith.maximumf %5, %6 : vector<8x128xf32>
    %c0_6 = arith.constant 0 : index
    %c0_7 = arith.constant 0 : index
    %8 = vector.load %arg4[%c0_6, %c0_7] : memref<128x64xf32, #tpu.memory_space<vmem>>, vector<128x64xf32>
    %cst_8 = arith.constant dense<0.000000e+00> : vector<8x64xf32>
    %9 = tpu.matmul %7, %8, %cst_8 {dimension_numbers = #tpu.dot_dimension_numbers<[1], [0], [0], [1], [0, 0, 1, 1], [], []>} : vector<8x128xf32>, vector<128x64xf32>, vector<8x64xf32> -> vector<8x64xf32>
    %c0_9 = arith.constant 0 : index
    %c0_10 = arith.constant 0 : index
    %10 = vector.load %arg5[%c0_9, %c0_10] : memref<1x64xf32, #tpu.memory_space<vmem>>, vector<1x64xf32>
    %11 = vector.broadcast %10 : vector<1x64xf32> to vector<8x64xf32>
    %12 = arith.addf %9, %11 : vector<8x64xf32>
    %c0_11 = arith.constant 0 : index
    %c0_12 = arith.constant 0 : index
    %13 = vector.load %arg6[%c0_11, %c0_12] : memref<8x64xf32, #tpu.memory_space<vmem>>, vector<8x64xf32>
    tpu.vector_store %arg6[%c0_11, %c0_12], %12 {strides = array<i32>} : memref<8x64xf32, #tpu.memory_space<vmem>>, vector<8x64xf32>,
    return
  }
  func.func @transform_0(%arg0: i32) -> (i32, i32) {
    %c0_i32 = arith.constant 0 : i32
    %c0_i32_0 = arith.constant 0 : i32
    return %arg0, %c0_i32 : i32, i32
  }
  func.func @transform_1(%arg0: i32) -> (i32, i32) {
    %c0_i32 = arith.constant 0 : i32
    %c0_i32_0 = arith.constant 0 : i32
    %c0_i32_1 = arith.constant 0 : i32
    return %c0_i32, %c0_i32_0 : i32, i32
  }
  func.func @transform_2(%arg0: i32) -> (i32, i32) {
    %c0_i32 = arith.constant 0 : i32
    %c0_i32_0 = arith.constant 0 : i32
    %c0_i32_1 = arith.constant 0 : i32
    return %c0_i32, %c0_i32_0 : i32, i32
  }
  func.func @transform_3(%arg0: i32) -> (i32, i32) {
    %c0_i32 = arith.constant 0 : i32
    %c0_i32_0 = arith.constant 0 : i32
    %c0_i32_1 = arith.constant 0 : i32
    return %c0_i32, %c0_i32_0 : i32, i32
  }
  func.func @transform_4(%arg0: i32) -> (i32, i32) {
    %c0_i32 = arith.constant 0 : i32
    %c0_i32_0 = arith.constant 0 : i32
    %c0_i32_1 = arith.constant 0 : i32
    return %c0_i32, %c0_i32_0 : i32, i32
  }
  func.func @transform_5(%arg0: i32) -> (i32, i32) {
    %c0_i32 = arith.constant 0 : i32
    %c0_i32_0 = arith.constant 0 : i32
    return %arg0, %c0_i32 : i32, i32
  }
}

</mosaic_0001>

<llo_original>
// kernel: tpu_custom_call.1
$region0: #{tpu_custom_call.1}
  #allocation0 [shape = 'u32[]', space=smem, size = 0x4, offset = 0x4, fixed_abs, tag = 'smem constant byte address 0x4 - core index']
  #allocation1 [shape = 'u32[144,128]{1,0:T(1,128)}', space=vmem, size = 0x12000, scoped, tag = 'internal scratch']
  %s0 = inlined_call_operand.vmem [shape: f32[8,28], index: 0, kind: input, shape index: {}]
  %s1 = inlined_call_operand.vmem [shape: f32[28,128], index: 1, kind: input, shape index: {}]
  %s2 = inlined_call_operand.vmem [shape: f32[1,128], index: 2, kind: input, shape index: {}]
  %s3 = inlined_call_operand.vmem [shape: f32[128,64], index: 3, kind: input, shape index: {}]
  %s4 = inlined_call_operand.vmem [shape: f32[1,64], index: 4, kind: input, shape index: {}]
  %s5 = inlined_call_operand.hbm [shape: f32[8,64], index: 5, kind: output, shape index: {}]
  %s6 = sld [smem:[#allocation0]]
  $region30: #{tpu_custom_call.1} parent=0
    _
  %s8 = ssub.s32 1, %s6
  %s9 = scalar_select 0, %s8, %s6
  $region1: #{tpu_custom_call.1} parent=0
    #allocation2 [shape = 'u8[4096]{0}', space=vmem, size = 0x1000, scoped, tag = 'output window, operand 0, single buffered']
    #allocation3 [shape = 's32[1]{0}', space=sflag, size = 0x4, scoped, tag = 'scoped memory for tpu_custom_call.1']
    %10 = vsyncpa [#allocation3], 0
    // Predicated region
    $region2: #{tpu_custom_call.1} parent=1 // pred_check
      _
    $region3: #{tpu_custom_call.1} parent=1 // pred_check_branch
      %12 = sbr.rel (0) target = $region5
    $region4: #{tpu_custom_call.1} parent=1 // pred_region
      _
    $region5: #{tpu_custom_call.1} parent=1 // pred_fallthru
      _
    // Predicated region
    $region6: #{tpu_custom_call.1} parent=1 // pred_check
      _
    $region7: #{tpu_custom_call.1} parent=1 // pred_check_branch
      %14 = sbr.rel (0) target = $region9
    $region8: #{tpu_custom_call.1} parent=1 // pred_region
      _
    $region9: #{tpu_custom_call.1} parent=1 // pred_fallthru
      _
    // Predicated region
    $region10: #{tpu_custom_call.1} parent=1 // pred_check
      _
    $region11: #{tpu_custom_call.1} parent=1 // pred_check_branch
      %16 = sbr.rel (0) target = $region13
    $region12: #{tpu_custom_call.1} parent=1 // pred_region
      _
    $region13: #{tpu_custom_call.1} parent=1 // pred_fallthru
      _
    // Predicated region
    $region14: #{tpu_custom_call.1} parent=1 // pred_check
      _
    $region15: #{tpu_custom_call.1} parent=1 // pred_check_branch
      %18 = sbr.rel (0) target = $region17
    $region16: #{tpu_custom_call.1} parent=1 // pred_region
      _
    $region17: #{tpu_custom_call.1} parent=1 // pred_fallthru
      _
    // Predicated region
    $region18: #{tpu_custom_call.1} parent=1 // pred_check
      _
    $region19: #{tpu_custom_call.1} parent=1 // pred_check_branch
      %20 = sbr.rel (0) target = $region21
    $region20: #{tpu_custom_call.1} parent=1 // pred_region
      _
    $region21: #{tpu_custom_call.1} parent=1 // pred_fallthru
      _
    %v21 = vld [vmem:[%s0] sm:$0xff]
    %v22 = vld [vmem:[%s1] sm:$0xff]
    %v23 = vld [vmem:[%s1 + $0x8] sm:$0xff]
    %v24 = vld [vmem:[%s1 + $0x10] sm:$0xff]
    %v25 = vld [vmem:[%s1 + $0x18] sm:$0xf]
    %v26 = vld [vmem:[%s2] sm:$0x1]
    %v28 = vlaneseq
    %v29 = vshrl.u32 %v28, 7
    %v30 = vsub.s32 0, %v29
    %v31 = vrot.slane %v26, %v30
    %vm33 = vcmask 228352
    %v35 = vsel %vm33, %v21, 0
    %vm37 = vcmask 1043456
    %v39 = vsel %vm37, %v25, 0
    %41 = vmatprep.subr.mxu0 0.0
    %42 = vmatpush1.msra.mxu0 %v22
    %43 = vmatprep.subr.mxu0 0.0
    %44 = vmatpush1.msra.mxu0 %v23
    %45 = vmatprep.subr.mxu0 0.0
    %46 = vmatpush1.msra.mxu0 %v24
    %47 = vmatprep.subr.mxu0 0.0
    %48 = vmatpush1.msra.mxu0 %v39
    %49 = vmatprep.subr.mxu0 0.0
    %50 = vmatpush1.msra.mxu0 0.0
    %51 = vmatprep.subr.mxu0 0.0
    %52 = vmatpush1.msra.mxu0 0.0
    %53 = vmatprep.subr.mxu0 0.0
    %54 = vmatpush1.msra.mxu0 0.0
    %55 = vmatprep.subr.mxu0 0.0
    %56 = vmatpush1.msra.mxu0 0.0
    %57 = vmatprep.subr.mxu0 0.0
    %58 = vmatpush1.msra.mxu0 0.0
    %59 = vmatprep.subr.mxu0 0.0
    %60 = vmatpush1.msra.mxu0 0.0
    %61 = vmatprep.subr.mxu0 0.0
    %62 = vmatpush1.msra.mxu0 0.0
    %63 = vmatprep.subr.mxu0 0.0
    %64 = vmatpush1.msra.mxu0 0.0
    %65 = vmatprep.subr.mxu0 0.0
    %66 = vmatpush1.msra.mxu0 0.0
    %67 = vmatprep.subr.mxu0 0.0
    %68 = vmatpush1.msra.mxu0 0.0
    %69 = vmatprep.subr.mxu0 0.0
    %70 = vmatpush1.msra.mxu0 0.0
    %71 = vmatprep.subr.mxu0 0.0
    %72 = vmatpush1.msra.mxu0 0.0
    %73 = vmatprep.subr.mxu0 0.0
    %74 = vmatpush1.msra.mxu0 0.0
    %75 = vmatprep.subr.mxu0 0.0
    %76 = vmatpush1.msra.mxu0 0.0
    %77 = vmatprep.subr.mxu0 0.0
    %78 = vmatpush1.msra.mxu0 0.0
    %79 = vmatprep.subr.mxu0 0.0
    %80 = vmatpush1.msra.mxu0 0.0
    %81 = vmatprep.subr.mxu0 0.0
    %82 = vmatpush1.msra.mxu0 0.0
    %83 = vmatprep.subr.mxu0 0.0
    %84 = vmatpush1.msra.mxu0 0.0
    %85 = vmatprep.subr.mxu0 0.0
    %86 = vmatpush1.msra.mxu0 0.0
    %87 = vmatprep.subr.mxu0 0.0
    %88 = vmatpush1.msra.mxu0 0.0
    %89 = vmatprep.subr.mxu0 0.0
    %90 = vmatpush1.msra.mxu0 0.0
    %91 = vmatprep.subr.mxu0 0.0
    %92 = vmatpush1.msra.mxu0 0.0
    %93 = vmatprep.subr.mxu0 0.0
    %94 = vmatpush1.msra.mxu0 0.0
    %95 = vmatprep.subr.mxu0 0.0
    %96 = vmatpush1.msra.mxu0 0.0
    %97 = vmatprep.subr.mxu0 0.0
    %98 = vmatpush1.msra.mxu0 0.0
    %99 = vmatprep.subr.mxu0 0.0
    %100 = vmatpush1.msra.mxu0 0.0
    %101 = vmatprep.subr.mxu0 0.0
    %102 = vmatpush1.msra.mxu0 0.0
    %103 = vmatprep.subr.mxu0 0.0
    %104 = vmatpush1.msra.mxu0 0.0
    %105 = vmatprep.mubr.f32.mxu0 0.0
    %106 = vmatmul.mubr.f32.gmra.mrb[0].mxu0 %v35
    %v107 = vpop.f32.mrb[0].mxu0
    %v108 = vadd.f32 %v31, %v107
    %v109 = vpop.f32.mrb[0].mxu0
    %110 = vdwg.mxu0
    %v111 = vmax.f32 %v108, 0.0
    %v112 = vld [vmem:[%s3] sm:$0xff]
    %v113 = vld [vmem:[%s3 + $0x8] sm:$0xff]
    %v114 = vld [vmem:[%s3 + $0x10] sm:$0xff]
    %v115 = vld [vmem:[%s3 + $0x18] sm:$0xff]
    %v116 = vld [vmem:[%s3 + $0x20] sm:$0xff]
    %v117 = vld [vmem:[%s3 + $0x28] sm:$0xff]
    %v118 = vld [vmem:[%s3 + $0x30] sm:$0xff]
    %v119 = vld [vmem:[%s3 + $0x38] sm:$0xff]
    %v120 = vld [vmem:[%s3 + $0x40] sm:$0xff]
    %v121 = vld [vmem:[%s3 + $0x48] sm:$0xff]
    %v122 = vld [vmem:[%s3 + $0x50] sm:$0xff]
    %v123 = vld [vmem:[%s3 + $0x58] sm:$0xff]
    %v124 = vld [vmem:[%s3 + $0x60] sm:$0xff]
    %v125 = vld [vmem:[%s3 + $0x68] sm:$0xff]
    %v126 = vld [vmem:[%s3 + $0x70] sm:$0xff]
    %v127 = vld [vmem:[%s3 + $0x78] sm:$0xff]
    %v128 = vld [vmem:[%s4] sm:$0x1]
    %v130 = vlaneseq
    %v131 = vshrl.u32 %v130, 7
    %v132 = vsub.s32 0, %v131
    %v133 = vrot.slane %v128, %v132
    %135 = vmatprep.subr.mxu0 0.0
    %136 = vmatpush1.msra.mxu0 %v112
    %137 = vmatprep.subr.mxu0 0.0
    %138 = vmatpush1.msra.mxu0 %v113
    %139 = vmatprep.subr.mxu0 0.0
    %140 = vmatpush1.msra.mxu0 %v114
    %141 = vmatprep.subr.mxu0 0.0
    %142 = vmatpush1.msra.mxu0 %v115
    %143 = vmatprep.subr.mxu0 0.0
    %144 = vmatpush1.msra.mxu0 %v116
    %145 = vmatprep.subr.mxu0 0.0
    %146 = vmatpush1.msra.mxu0 %v117
    %147 = vmatprep.subr.mxu0 0.0
    %148 = vmatpush1.msra.mxu0 %v118
    %149 = vmatprep.subr.mxu0 0.0
    %150 = vmatpush1.msra.mxu0 %v119
    %151 = vmatprep.subr.mxu0 0.0
    %152 = vmatpush1.msra.mxu0 %v120
    %153 = vmatprep.subr.mxu0 0.0
    %154 = vmatpush1.msra.mxu0 %v121
    %155 = vmatprep.subr.mxu0 0.0
    %156 = vmatpush1.msra.mxu0 %v122
    %157 = vmatprep.subr.mxu0 0.0
    %158 = vmatpush1.msra.mxu0 %v123
    %159 = vmatprep.subr.mxu0 0.0
    %160 = vmatpush1.msra.mxu0 %v124
    %161 = vmatprep.subr.mxu0 0.0
    %162 = vmatpush1.msra.mxu0 %v125
    %163 = vmatprep.subr.mxu0 0.0
    %164 = vmatpush1.msra.mxu0 %v126
    %165 = vmatprep.subr.mxu0 0.0
    %166 = vmatpush1.msra.mxu0 %v127
    %167 = vmatprep.subr.mxu0 0.0
    %168 = vmatpush1.msra.mxu0 0.0
    %169 = vmatprep.subr.mxu0 0.0
    %170 = vmatpush1.msra.mxu0 0.0
    %171 = vmatprep.subr.mxu0 0.0
    %172 = vmatpush1.msra.mxu0 0.0
    %173 = vmatprep.subr.mxu0 0.0
    %174 = vmatpush1.msra.mxu0 0.0
    %175 = vmatprep.subr.mxu0 0.0
    %176 = vmatpush1.msra.mxu0 0.0
    %177 = vmatprep.subr.mxu0 0.0
    %178 = vmatpush1.msra.mxu0 0.0
    %179 = vmatprep.subr.mxu0 0.0
    %180 = vmatpush1.msra.mxu0 0.0
    %181 = vmatprep.subr.mxu0 0.0
    %182 = vmatpush1.msra.mxu0 0.0
    %183 = vmatprep.subr.mxu0 0.0
    %184 = vmatpush1.msra.mxu0 0.0
    %185 = vmatprep.subr.mxu0 0.0
    %186 = vmatpush1.msra.mxu0 0.0
    %187 = vmatprep.subr.mxu0 0.0
    %188 = vmatpush1.msra.mxu0 0.0
    %189 = vmatprep.subr.mxu0 0.0
    %190 = vmatpush1.msra.mxu0 0.0
    %191 = vmatprep.subr.mxu0 0.0
    %192 = vmatpush1.msra.mxu0 0.0
    %193 = vmatprep.subr.mxu0 0.0
    %194 = vmatpush1.msra.mxu0 0.0
    %195 = vmatprep.subr.mxu0 0.0
    %196 = vmatpush1.msra.mxu0 0.0
    %197 = vmatprep.subr.mxu0 0.0
    %198 = vmatpush1.msra.mxu0 0.0
    %199 = vmatprep.mubr.f32.mxu0 0.0
    %200 = vmatmul.mubr.f32.gmra.mrb[0].mxu0 %v111
    %v201 = vpop.f32.mrb[0].mxu0
    %v202 = vadd.f32 %v133, %v201
    %v203 = vpop.f32.mrb[0].mxu0
    %204 = vdwg.mxu0
    %vm205 = vcmask 523264
    %206 = vst.msk [vmem:[#allocation2] sm:$0xff] %vm205, %v202
    // Predicated region
    $region22: #{tpu_custom_call.1} parent=1 // pred_check
      _
    $region23: #{tpu_custom_call.1} parent=1 // pred_check_branch
      %208 = sbr.rel (0) target = $region25
    $region24: #{tpu_custom_call.1} parent=1 // pred_region
      %s210 = ssub.s32 128, 128
      %211 = vsyncadd [#allocation3], %s210
      %s213 = sshll.u32 [#allocation2], 4
      %s214 = int_to_ptr.vmem [resolvable:$true] %s213
      %216 = dma.vmem_to_hbm [thread:$0]  %s214, 128, %s5, [#allocation3]
    $region25: #{tpu_custom_call.1} parent=1 // pred_fallthru
      _
    // Predicated region
    $region26: #{tpu_custom_call.1} parent=1 // pred_check
      _
    $region27: #{tpu_custom_call.1} parent=1 // pred_check_branch
      %218 = sbr.rel (0) target = $region29
    $region28: #{tpu_custom_call.1} parent=1 // pred_region
      %219 = dma.done [#allocation3], 128
    $region29: #{tpu_custom_call.1} parent=1 // pred_fallthru
      _
    %220 = vsyncpa [#allocation3], 1

</llo_original>
